<compile_context>
chip_gen: v7x
topology: tpu7x:2x2x1
jax: 0.10.0
libtpu: 0.0.40
codegen_flags: <defaults>
</compile_context>

<pallas_src>
import functools

import jax
import jax.numpy as jnp
from jax.experimental import pallas as pl
from jax.experimental.pallas import tpu as pltpu

_F32 = 4


def _round_up(a, b):
    return (a + b - 1) // b * b


def _vmem_budget_and_limit(budget_override=None):
    """Generation-aware VMEM budget (for tile sizing) and scoped limit."""
    try:
        cap = int(pltpu.get_tpu_info().vmem_capacity_bytes)
    except Exception:
        cap = 64 * 1024 * 1024            # conservative: v7x per-core VMEM
    budget = (3 * cap) // 8                # 48 MiB on 128-MiB parts, 24 MiB on v7x
    limit = (3 * cap) // 4                 # 96 MiB / 48 MiB (headroom kept)
    if budget_override is not None:
        budget = int(budget_override)
    return budget, limit


# ----------------------------------------------------------------------------
# Single-pass kernels (whole class dim in one block, lane-dense output).
# ----------------------------------------------------------------------------
def _ls_ce_int_kernel(x_ref, lab_ref, out_ref, *, w_t, w_u):
    """loss = LSE(x) - sum_j x_j * (w_u + w_t*[j == label]);  w_t + N*w_u = 1."""
    x = x_ref[...].astype(jnp.float32)                         # (bb, N)
    lab = lab_ref[...]                                         # (bb, 1) int32
    col = jax.lax.broadcasted_iota(jnp.int32, (1, x.shape[-1]), 1)
    w = jnp.where(col == lab, w_u + w_t, w_u)                  # broadcast (bb, N)

    m = jnp.max(x, axis=-1, keepdims=True)                     # (bb, 1)
    shifted = x - m
    lse = jnp.log(jnp.sum(jnp.exp(shifted), axis=-1))          # (bb,)
    wsum = jnp.sum(w * shifted, axis=-1)                       # (bb,)
    out_ref[...] = (lse - wsum)[None, :]                       # (1, bb) lane-dense


def _ls_ce_dense_kernel(x_ref, lab_ref, out_ref, *, smoothing, inv_n):
    """Dense [bb, N] labels; smoothing folded into scalars after reductions."""
    x = x_ref[...].astype(jnp.float32)                         # (bb, N)
    lab = lab_ref[...].astype(jnp.float32)                     # (bb, N)

    m = jnp.max(x, axis=-1, keepdims=True)
    shifted = x - m
    lse = jnp.log(jnp.sum(jnp.exp(shifted), axis=-1))          # (bb,)
    labsum = jnp.sum(lab, axis=-1)                             # (bb,)
    labx = jnp.sum(lab * shifted, axis=-1)                     # (bb,)
    xsum = jnp.sum(shifted, axis=-1)                           # (bb,)

    w_t = 1.0 - smoothing
    lsum = w_t * labsum + smoothing                            # sum_j lab'_j
    wsum = w_t * labx + smoothing * inv_n * xsum               # sum_j lab'_j*shifted_j
    out_ref[...] = (lsum * lse - wsum)[None, :]                # (1, bb)


# ----------------------------------------------------------------------------
# Class-dim-blocked kernels (flash-style online log-sum-exp) for large N.
# ----------------------------------------------------------------------------
def _ls_ce_int_blocked_kernel(x_ref, lab_ref, out_ref, m_acc, s_acc, wx_acc,
                              *, w_t, w_u, n_total, block_n, needs_mask):
    kn = pl.program_id(1)

    @pl.when(kn == 0)
    def _():
        m_acc[...] = jnp.full(m_acc.shape, -jnp.inf, jnp.float32)
        s_acc[...] = jnp.zeros(s_acc.shape, jnp.float32)
        wx_acc[...] = jnp.zeros(wx_acc.shape, jnp.float32)

    x = x_ref[...].astype(jnp.float32)                         # (bb, tn)
    lab = lab_ref[...]                                         # (bb, 1) int32
    col = jax.lax.broadcasted_iota(jnp.int32, (1, block_n), 1) + kn * block_n
    w = jnp.where(col == lab, w_u + w_t, w_u)                  # (bb, tn)
    if needs_mask:
        valid = col < n_total                                  # (1, tn)
        x_lse = jnp.where(valid, x, -jnp.inf)
        x_w = jnp.where(valid, x, 0.0)
    else:
        x_lse = x
        x_w = x

    m_prev = m_acc[...]
    m_new = jnp.maximum(m_prev, jnp.max(x_lse, axis=-1, keepdims=True))
    s_acc[...] = (s_acc[...] * jnp.exp(m_prev - m_new)
                  + jnp.sum(jnp.exp(x_lse - m_new), axis=-1, keepdims=True))
    wx_acc[...] += jnp.sum(w * x_w, axis=-1, keepdims=True)
    m_acc[...] = m_new

    @pl.when(kn == pl.num_programs(1) - 1)
    def _():
        # sum_j w_j == 1 over the real classes, so loss = LSE(x) - sum(w*x).
        out_ref[...] = m_acc[...] + jnp.log(s_acc[...]) - wx_acc[...]


def _ls_ce_dense_blocked_kernel(x_ref, lab_ref, out_ref, m_acc, s_acc,
                                lsum_acc, wx_acc, *, smoothing, inv_n,
                                n_total, block_n, needs_mask):
    kn = pl.program_id(1)

    @pl.when(kn == 0)
    def _():
        m_acc[...] = jnp.full(m_acc.shape, -jnp.inf, jnp.float32)
        s_acc[...] = jnp.zeros(s_acc.shape, jnp.float32)
        lsum_acc[...] = jnp.zeros(lsum_acc.shape, jnp.float32)
        wx_acc[...] = jnp.zeros(wx_acc.shape, jnp.float32)

    x = x_ref[...].astype(jnp.float32)                         # (bb, tn)
    lab = lab_ref[...].astype(jnp.float32)                     # (bb, tn)
    if needs_mask:
        col = jax.lax.broadcasted_iota(jnp.int32, (1, block_n), 1) + kn * block_n
        valid = col < n_total
        x_lse = jnp.where(valid, x, -jnp.inf)
        x_w = jnp.where(valid, x, 0.0)
        lab = jnp.where(valid, lab, 0.0)
    else:
        x_lse = x
        x_w = x

    m_prev = m_acc[...]
    m_new = jnp.maximum(m_prev, jnp.max(x_lse, axis=-1, keepdims=True))
    s_acc[...] = (s_acc[...] * jnp.exp(m_prev - m_new)
                  + jnp.sum(jnp.exp(x_lse - m_new), axis=-1, keepdims=True))
    m_acc[...] = m_new

    w_t = 1.0 - smoothing
    lsum_acc[...] += jnp.sum(lab, axis=-1, keepdims=True)
    wx_acc[...] += (w_t * jnp.sum(lab * x_w, axis=-1, keepdims=True)
                    + smoothing * inv_n * jnp.sum(x_w, axis=-1, keepdims=True))

    @pl.when(kn == pl.num_programs(1) - 1)
    def _():
        lse = m_acc[...] + jnp.log(s_acc[...])                 # true LSE(x)
        out_ref[...] = (w_t * lsum_acc[...] + smoothing) * lse - wx_acc[...]


# ----------------------------------------------------------------------------
# Wrapper
# ----------------------------------------------------------------------------
def label_smooth_cross_entropy(x, labels, *, smoothing=0.0, num_classes=None,
                               reduction="mean", block_b=None, block_n=None,
                               vmem_budget_bytes=None):
    """Mirrors LabelSmoothCrossEntropy.forward.

    x:      [B, N] float logits (f32 or bf16)
    labels: [B] int class ids  OR  [B, N] dense label distribution
    """
    assert 0.0 <= smoothing < 1.0
    assert reduction in ("mean", "sum", "none")

    B, N = x.shape
    nc = N if num_classes is None else int(num_classes)
    assert nc == N, "num_classes must match the class (last) dim of x"

    xi = jnp.dtype(x.dtype).itemsize           # keep bf16 logits bf16 in HBM/DMA
    budget, vmem_limit = _vmem_budget_and_limit(vmem_budget_bytes)

    if labels.ndim == 1:
        dense = False
        # TODO(synk): out-of-range class ids (<0 or >=N) silently contribute a
        # zero target term instead of erroring like PyTorch's scatter_.
        labels = labels.astype(jnp.int32).reshape(B, 1)
        stream_row = N * xi + 4
        temp_row = 4 * N * _F32                # x_f32, shifted, exp, weighted
        per_elem = 2 * xi + 4 * _F32
    elif labels.ndim == 2:
        dense = True
        assert labels.shape == (B, N)
        li = jnp.dtype(labels.dtype).itemsize
        stream_row = N * (xi + li)
        temp_row = 6 * N * _F32                # + lab_f32, lab*shifted
        per_elem = 2 * (xi + li) + 6 * _F32
    else:
        raise ValueError("labels must be rank 1 or 2")

    w_t = 1.0 - float(smoothing)
    w_u = float(smoothing) / float(nc)

    # Largest batch tile whose double-buffered DMA + f32 temporaries fit budget.
    bb_cap = max(1, budget // (2 * stream_row + temp_row))
    use_blocked = (block_n is not None) or (block_b is None and bb_cap < 128)

    if not use_blocked:
        # ---------------- single-pass path (N in one block) ----------------
        if block_b is not None:
            bb = max(128, _round_up(int(block_b), 128))
        else:
            bb = min((bb_cap // 128) * 128, 1024, _round_up(B, 128))
            if B > 128:            # give both v7x TensorCores >= 1 grid step
                bb = min(bb, _round_up(pl.cdiv(B, 2), 128))
            bb = max(bb, 128)

        grid = (pl.cdiv(B, bb),)
        if dense:
            kernel = functools.partial(_ls_ce_dense_kernel,
                                       smoothing=float(smoothing),
                                       inv_n=1.0 / float(nc))
            lab_spec = pl.BlockSpec((bb, N), lambda i: (i, 0))
        else:
            kernel = functools.partial(_ls_ce_int_kernel, w_t=w_t, w_u=w_u)
            lab_spec = pl.BlockSpec((bb, 1), lambda i: (i, 0))

        per_row = pl.pallas_call(
            kernel,
            out_shape=jax.ShapeDtypeStruct((1, B), jnp.float32),
            grid_spec=pltpu.PrefetchScalarGridSpec(
                num_scalar_prefetch=0,
                grid=grid,
                in_specs=[pl.BlockSpec((bb, N), lambda i: (i, 0)), lab_spec],
                out_specs=pl.BlockSpec((1, bb), lambda i: (0, i)),
            ),
            compiler_params=pltpu.CompilerParams(
                dimension_semantics=("parallel",),
                vmem_limit_bytes=vmem_limit,
            ),
        )(x, labels)
        loss = per_row[0, :]
    else:
        # ------------- class-dim-blocked path (online LSE) -----------------
        bb = 128 if block_b is None else max(8, _round_up(int(block_b), 8))
        if block_n is not None:
            tn = max(128, _round_up(int(block_n), 128))
        else:
            tn = max(128, (budget // (bb * per_elem) // 128) * 128)
        tn = min(tn, _round_up(N, 128))
        needs_mask = (N % tn) != 0

        grid = (pl.cdiv(B, bb), pl.cdiv(N, tn))
        n_acc = 4 if dense else 3
        scratch = [pltpu.VMEM((bb, 1), jnp.float32) for _ in range(n_acc)]

        if dense:
            kernel = functools.partial(
                _ls_ce_dense_blocked_kernel, smoothing=float(smoothing),
                inv_n=1.0 / float(nc), n_total=N, block_n=tn,
                needs_mask=needs_mask)
            lab_spec = pl.BlockSpec((bb, tn), lambda i, k: (i, k))
        else:
            kernel = functools.partial(
                _ls_ce_int_blocked_kernel, w_t=w_t, w_u=w_u, n_total=N,
                block_n=tn, needs_mask=needs_mask)
            lab_spec = pl.BlockSpec((bb, 1), lambda i, k: (i, 0))

        per_row = pl.pallas_call(
            kernel,
            out_shape=jax.ShapeDtypeStruct((B, 1), jnp.float32),
            grid_spec=pltpu.PrefetchScalarGridSpec(
                num_scalar_prefetch=0,
                grid=grid,
                in_specs=[pl.BlockSpec((bb, tn), lambda i, k: (i, k)), lab_spec],
                out_specs=pl.BlockSpec((bb, 1), lambda i, k: (i, 0)),
                scratch_shapes=scratch,
            ),
            compiler_params=pltpu.CompilerParams(
                dimension_semantics=("parallel", "arbitrary"),
                vmem_limit_bytes=vmem_limit,
            ),
        )(x, labels)
        loss = per_row[:, 0]

    if reduction == "sum":
        loss = jnp.sum(loss)
    elif reduction == "mean":
        loss = jnp.mean(loss)                   # denominator = B
    return loss


def _reference(x, labels, *, smoothing, num_classes, reduction):
    if labels.ndim == 1:
        labels = jax.nn.one_hot(labels.astype(jnp.int32), num_classes,
                                dtype=jnp.float32)
    labels = labels.astype(jnp.float32)
    labels = labels * (1.0 - smoothing) + smoothing / num_classes
    log_probs = jax.nn.log_softmax(x.astype(jnp.float32), axis=-1)
    loss = jnp.sum(-labels * log_probs, axis=-1)
    if reduction == "sum":
        return jnp.sum(loss)
    if reduction == "mean":
        return jnp.mean(loss)
    return loss


if __name__ == "__main__":
    key = jax.random.PRNGKey(0)
    smoothing = 0.1

    # ---- single-pass path (small N) ------------------------------------
    B, N = 10, 32                      # B deliberately NOT a tile multiple
    kx, kl, ks, kx2, ks2 = jax.random.split(key, 5)
    x = jax.random.normal(kx, (B, N), dtype=jnp.float32)
    labels = jax.random.randint(kl, (B,), 0, N, dtype=jnp.int32)
    soft = jax.nn.softmax(jax.random.normal(ks, (B, N), dtype=jnp.float32), -1)

    out_none = label_smooth_cross_entropy(
        x, labels, smoothing=smoothing, num_classes=N, reduction="none")
    out_mean = label_smooth_cross_entropy(
        x, labels, smoothing=smoothing, num_classes=N, reduction="mean")
    out_soft = label_smooth_cross_entropy(
        x, soft, smoothing=smoothing, num_classes=N, reduction="sum")
    out_bf16 = label_smooth_cross_entropy(
        x.astype(jnp.bfloat16), labels, smoothing=smoothing, num_classes=N,
        reduction="none")

    # ---- class-blocked online-LSE path (forced at a small, ragged N) ----
    B2, N2 = 10, 160                   # 160 % 128 != 0 -> exercises masking
    x2 = jax.random.normal(kx2, (B2, N2), dtype=jnp.float32)
    labels2 = jax.random.randint(kl, (B2,), 0, N2, dtype=jnp.int32)
    soft2 = jax.nn.softmax(jax.random.normal(ks2, (B2, N2), jnp.float32), -1)

    out_blk_int = label_smooth_cross_entropy(
        x2, labels2, smoothing=smoothing, num_classes=N2, reduction="none",
        block_b=8, block_n=128)
    out_blk_dense = label_smooth_cross_entropy(
        x2, soft2, smoothing=smoothing, num_classes=N2, reduction="mean",
        block_b=8, block_n=128)

    jax.block_until_ready((out_none, out_mean, out_soft, out_bf16,
                           out_blk_int, out_blk_dense))

    ref_none = _reference(x, labels, smoothing=smoothing, num_classes=N,
                          reduction="none")
    ref_mean = _reference(x, labels, smoothing=smoothing, num_classes=N,
                          reduction="mean")
    ref_soft = _reference(x, soft, smoothing=smoothing, num_classes=N,
                          reduction="sum")
    ref_blk_int = _reference(x2, labels2, smoothing=smoothing, num_classes=N2,
                             reduction="none")
    ref_blk_dense = _reference(x2, soft2, smoothing=smoothing, num_classes=N2,
                               reduction="mean")

    assert out_none.shape == (B,)
    assert jnp.allclose(out_none, ref_none, atol=1e-5, rtol=1e-5)
    assert jnp.allclose(out_mean, ref_mean, atol=1e-5, rtol=1e-5)
    assert jnp.allclose(out_soft, ref_soft, atol=1e-4, rtol=1e-4)
    assert jnp.all(jnp.isfinite(out_bf16))
    assert jnp.allclose(out_bf16, ref_none, atol=1e-1, rtol=1e-1)
    assert out_blk_int.shape == (B2,)
    assert jnp.allclose(out_blk_int, ref_blk_int, atol=1e-4, rtol=1e-4)
    assert jnp.allclose(out_blk_dense, ref_blk_dense, atol=1e-4, rtol=1e-4)

    print("KERNEL_OK")
</pallas_src>

<mosaic_0001>
module attributes {stable_mosaic.version = 11 : i64} {
  func.func @_ls_ce_int_kernel(%arg0: i32, %arg1: memref<128x32xf32, #tpu.memory_space<vmem>>, %arg2: memref<128x1xi32, #tpu.memory_space<vmem>>, %arg3: memref<1x128xf32, #tpu.memory_space<vmem>>) attributes {dimension_semantics = [#tpu.dimension_semantics<parallel>], iteration_bounds = array<i64: 1>, scalar_prefetch = 0 : i64, scratch_operands = 0 : i64, tpu.core_type = #tpu.core_type<tc>, window_params = [{transform_indices = @transform_0, window_bounds = array<i64: 128, 32>}, {transform_indices = @transform_1, window_bounds = array<i64: 128, 1>}, {transform_indices = @transform_2, window_bounds = array<i64: 1, 128>}]} {
    %c0 = arith.constant 0 : index
    %c0_0 = arith.constant 0 : index
    %0 = vector.load %arg1[%c0, %c0_0] : memref<128x32xf32, #tpu.memory_space<vmem>>, vector<128x32xf32>
    %c0_1 = arith.constant 0 : index
    %c0_2 = arith.constant 0 : index
    %1 = vector.load %arg2[%c0_1, %c0_2] : memref<128x1xi32, #tpu.memory_space<vmem>>, vector<128x1xi32>
    %2 = tpu.iota {dimensions = array<i32: 1>} : vector<1x32xi32>
    %3 = vector.broadcast %2 : vector<1x32xi32> to vector<128x32xi32>
    %4 = vector.broadcast %1 : vector<128x1xi32> to vector<128x32xi32>
    %5 = arith.cmpi eq, %3, %4 : vector<128x32xi32>
    %cst = arith.constant 0.903124988 : f32
    %cst_3 = arith.constant 3.125000e-03 : f32
    %6 = vector.broadcast %cst : f32 to vector<128x32xf32>
    %7 = vector.broadcast %cst_3 : f32 to vector<128x32xf32>
    %8 = arith.select %5, %6, %7 : vector<128x32xi1>, vector<128x32xf32>
    %cst_4 = arith.constant dense<0xFF800000> : vector<128xf32>
    %9 = vector.multi_reduction <maximumf>, %0, %cst_4 [1] : vector<128x32xf32> to vector<128xf32>
    %10 = vector.shape_cast %9 : vector<128xf32> to vector<128x1xf32>
    %11 = vector.broadcast %10 : vector<128x1xf32> to vector<128x32xf32>
    %12 = arith.subf %0, %11 : vector<128x32xf32>
    %13 = math.exp %12 : vector<128x32xf32>
    %cst_5 = arith.constant dense<0.000000e+00> : vector<128xf32>
    %14 = vector.multi_reduction <add>, %13, %cst_5 [1] : vector<128x32xf32> to vector<128xf32>
    %15 = math.log %14 : vector<128xf32>
    %16 = arith.mulf %8, %12 : vector<128x32xf32>
    %cst_6 = arith.constant dense<0.000000e+00> : vector<128xf32>
    %17 = vector.multi_reduction <add>, %16, %cst_6 [1] : vector<128x32xf32> to vector<128xf32>
    %18 = arith.subf %15, %17 : vector<128xf32>
    %19 = vector.shape_cast %18 : vector<128xf32> to vector<1x128xf32>
    %c0_7 = arith.constant 0 : index
    %c0_8 = arith.constant 0 : index
    %20 = vector.load %arg3[%c0_7, %c0_8] : memref<1x128xf32, #tpu.memory_space<vmem>>, vector<1x128xf32>
    tpu.vector_store %arg3[%c0_7, %c0_8], %19 {strides = array<i32>} : memref<1x128xf32, #tpu.memory_space<vmem>>, vector<1x128xf32>,
    return
  }
  func.func @transform_0(%arg0: i32) -> (i32, i32) {
    %c0_i32 = arith.constant 0 : i32
    %c0_i32_0 = arith.constant 0 : i32
    return %arg0, %c0_i32 : i32, i32
  }
  func.func @transform_1(%arg0: i32) -> (i32, i32) {
    %c0_i32 = arith.constant 0 : i32
    %c0_i32_0 = arith.constant 0 : i32
    return %arg0, %c0_i32 : i32, i32
  }
  func.func @transform_2(%arg0: i32) -> (i32, i32) {
    %c0_i32 = arith.constant 0 : i32
    %c0_i32_0 = arith.constant 0 : i32
    return %c0_i32, %arg0 : i32, i32
  }
}

</mosaic_0001>

<llo_original>
// kernel: tpu_custom_call.1
$region0: #{tpu_custom_call.1}
  #allocation0 [shape = 'u32[]', space=smem, size = 0x4, offset = 0x4, fixed_abs, tag = 'smem constant byte address 0x4 - core index']
  #allocation1 [shape = 'u32[144,128]{1,0:T(1,128)}', space=vmem, size = 0x12000, scoped, tag = 'internal scratch']
  %s0 = inlined_call_operand.vmem [shape: f32[10,32], index: 0, kind: input, shape index: {}]
  %s1 = inlined_call_operand.vmem [shape: s32[10,1], index: 1, kind: input, shape index: {}]
  %s2 = inlined_call_operand.hbm [shape: f32[1,10], index: 2, kind: output, shape index: {}]
  %s3 = sld [smem:[#allocation0]]
  $region18: #{tpu_custom_call.1} parent=0
    _
  %s5 = ssub.s32 1, %s3
  %s6 = scalar_select 0, %s5, %s3
  $region1: #{tpu_custom_call.1} parent=0
    #allocation2 [shape = 'u8[512]{0}', space=vmem, size = 0x400, scoped, tag = 'output window, operand 0, single buffered']
    #allocation3 [shape = 's32[1]{0}', space=sflag, size = 0x4, scoped, tag = 'scoped memory for tpu_custom_call.1']
    %7 = vsyncpa [#allocation3], 0
    // Predicated region
    $region2: #{tpu_custom_call.1} parent=1 // pred_check
      _
    $region3: #{tpu_custom_call.1} parent=1 // pred_check_branch
      %9 = sbr.rel (0) target = $region5
    $region4: #{tpu_custom_call.1} parent=1 // pred_region
      _
    $region5: #{tpu_custom_call.1} parent=1 // pred_fallthru
      _
    // Predicated region
    $region6: #{tpu_custom_call.1} parent=1 // pred_check
      _
    $region7: #{tpu_custom_call.1} parent=1 // pred_check_branch
      %11 = sbr.rel (0) target = $region9
    $region8: #{tpu_custom_call.1} parent=1 // pred_region
      _
    $region9: #{tpu_custom_call.1} parent=1 // pred_fallthru
      _
    %v12 = vld [vmem:[%s0] sm:$0xff]
    %v13 = vld [vmem:[%s0 + $0x8] sm:$0xff]
    %v14 = vld [vmem:[%s0 + $0x10] sm:$0xff]
    %v15 = vld [vmem:[%s0 + $0x18] sm:$0xff]
    %v16 = vld [vmem:[%s0 + $0x20] sm:$0xff]
    %v17 = vld [vmem:[%s0 + $0x28] sm:$0xff]
    %v18 = vld [vmem:[%s0 + $0x30] sm:$0xff]
    %v19 = vld [vmem:[%s0 + $0x38] sm:$0xff]
    %v20 = vld [vmem:[%s0 + $0x40] sm:$0xff]
    %v21 = vld [vmem:[%s0 + $0x48] sm:$0xff]
    %v22 = vld [vmem:[%s0 + $0x50] sm:$0xff]
    %v23 = vld [vmem:[%s0 + $0x58] sm:$0xff]
    %v24 = vld [vmem:[%s0 + $0x60] sm:$0xff]
    %v25 = vld [vmem:[%s0 + $0x68] sm:$0xff]
    %v26 = vld [vmem:[%s0 + $0x70] sm:$0xff]
    %v27 = vld [vmem:[%s0 + $0x78] sm:$0xff]
    %v28 = vld [vmem:[%s1] sm:$0xff]
    %v29 = vld [vmem:[%s1 + $0x8] sm:$0xff]
    %v30 = vld [vmem:[%s1 + $0x10] sm:$0xff]
    %v31 = vld [vmem:[%s1 + $0x18] sm:$0xff]
    %v32 = vld [vmem:[%s1 + $0x20] sm:$0xff]
    %v33 = vld [vmem:[%s1 + $0x28] sm:$0xff]
    %v34 = vld [vmem:[%s1 + $0x30] sm:$0xff]
    %v35 = vld [vmem:[%s1 + $0x38] sm:$0xff]
    %v36 = vld [vmem:[%s1 + $0x40] sm:$0xff]
    %v37 = vld [vmem:[%s1 + $0x48] sm:$0xff]
    %v38 = vld [vmem:[%s1 + $0x50] sm:$0xff]
    %v39 = vld [vmem:[%s1 + $0x58] sm:$0xff]
    %v40 = vld [vmem:[%s1 + $0x60] sm:$0xff]
    %v41 = vld [vmem:[%s1 + $0x68] sm:$0xff]
    %v42 = vld [vmem:[%s1 + $0x70] sm:$0xff]
    %v43 = vld [vmem:[%s1 + $0x78] sm:$0xff]
    %v44 = vlaneseq
    %v45 = vand.u32 %v44, 127
    %46 = vset.pattern.permute.xlu0 0
    %47 = vperm.xlu0 %46, %v28
    %v48 = vpop.permute.xlu0 %47
    %49 = vset.pattern.permute.xlu0 0
    %50 = vperm.xlu0 %49, %v29
    %v51 = vpop.permute.xlu0 %50
    %52 = vset.pattern.permute.xlu0 0
    %53 = vperm.xlu0 %52, %v30
    %v54 = vpop.permute.xlu0 %53
    %55 = vset.pattern.permute.xlu0 0
    %56 = vperm.xlu0 %55, %v31
    %v57 = vpop.permute.xlu0 %56
    %58 = vset.pattern.permute.xlu0 0
    %59 = vperm.xlu0 %58, %v32
    %v60 = vpop.permute.xlu0 %59
    %61 = vset.pattern.permute.xlu0 0
    %62 = vperm.xlu0 %61, %v33
    %v63 = vpop.permute.xlu0 %62
    %64 = vset.pattern.permute.xlu0 0
    %65 = vperm.xlu0 %64, %v34
    %v66 = vpop.permute.xlu0 %65
    %67 = vset.pattern.permute.xlu0 0
    %68 = vperm.xlu0 %67, %v35
    %v69 = vpop.permute.xlu0 %68
    %70 = vset.pattern.permute.xlu0 0
    %71 = vperm.xlu0 %70, %v36
    %v72 = vpop.permute.xlu0 %71
    %73 = vset.pattern.permute.xlu0 0
    %74 = vperm.xlu0 %73, %v37
    %v75 = vpop.permute.xlu0 %74
    %76 = vset.pattern.permute.xlu0 0
    %77 = vperm.xlu0 %76, %v38
    %v78 = vpop.permute.xlu0 %77
    %79 = vset.pattern.permute.xlu0 0
    %80 = vperm.xlu0 %79, %v39
    %v81 = vpop.permute.xlu0 %80
    %82 = vset.pattern.permute.xlu0 0
    %83 = vperm.xlu0 %82, %v40
    %v84 = vpop.permute.xlu0 %83
    %85 = vset.pattern.permute.xlu0 0
    %86 = vperm.xlu0 %85, %v41
    %v87 = vpop.permute.xlu0 %86
    %88 = vset.pattern.permute.xlu0 0
    %89 = vperm.xlu0 %88, %v42
    %v90 = vpop.permute.xlu0 %89
    %91 = vset.pattern.permute.xlu0 0
    %92 = vperm.xlu0 %91, %v43
    %v93 = vpop.permute.xlu0 %92
    %vm94 = vcmp.eq.s32.totalorder %v45, %v48
    %vm95 = vcmp.eq.s32.totalorder %v45, %v51
    %vm96 = vcmp.eq.s32.totalorder %v45, %v54
    %vm97 = vcmp.eq.s32.totalorder %v45, %v57
    %vm98 = vcmp.eq.s32.totalorder %v45, %v60
    %vm99 = vcmp.eq.s32.totalorder %v45, %v63
    %vm100 = vcmp.eq.s32.totalorder %v45, %v66
    %vm101 = vcmp.eq.s32.totalorder %v45, %v69
    %vm102 = vcmp.eq.s32.totalorder %v45, %v72
    %vm103 = vcmp.eq.s32.totalorder %v45, %v75
    %vm104 = vcmp.eq.s32.totalorder %v45, %v78
    %vm105 = vcmp.eq.s32.totalorder %v45, %v81
    %vm106 = vcmp.eq.s32.totalorder %v45, %v84
    %vm107 = vcmp.eq.s32.totalorder %v45, %v87
    %vm108 = vcmp.eq.s32.totalorder %v45, %v90
    %vm109 = vcmp.eq.s32.totalorder %v45, %v93
    %v110 = vsel %vm94, 0.903125, 0.003125
    %v111 = vsel %vm95, 0.903125, 0.003125
    %v112 = vsel %vm96, 0.903125, 0.003125
    %v113 = vsel %vm97, 0.903125, 0.003125
    %v114 = vsel %vm98, 0.903125, 0.003125
    %v115 = vsel %vm99, 0.903125, 0.003125
    %v116 = vsel %vm100, 0.903125, 0.003125
    %v117 = vsel %vm101, 0.903125, 0.003125
    %v118 = vsel %vm102, 0.903125, 0.003125
    %v119 = vsel %vm103, 0.903125, 0.003125
    %v120 = vsel %vm104, 0.903125, 0.003125
    %v121 = vsel %vm105, 0.903125, 0.003125
    %v122 = vsel %vm106, 0.903125, 0.003125
    %v123 = vsel %vm107, 0.903125, 0.003125
    %v124 = vsel %vm108, 0.903125, 0.003125
    %v125 = vsel %vm109, 0.903125, 0.003125
    %vm126 = vcmask 261120
    %v127 = vsel %vm126, %v12, -inf
    %128 = vmax.xlane.f32.xlu0 %v127
    %v129 = vpop.xlane.xlu0 %128
    %v130 = vsel %vm126, %v13, -inf
    %131 = vmax.xlane.f32.xlu0 %v130
    %v132 = vpop.xlane.xlu0 %131
    %v133 = vsel %vm126, %v14, -inf
    %134 = vmax.xlane.f32.xlu0 %v133
    %v135 = vpop.xlane.xlu0 %134
    %v136 = vsel %vm126, %v15, -inf
    %137 = vmax.xlane.f32.xlu0 %v136
    %v138 = vpop.xlane.xlu0 %137
    %v139 = vsel %vm126, %v16, -inf
    %140 = vmax.xlane.f32.xlu0 %v139
    %v141 = vpop.xlane.xlu0 %140
    %v142 = vsel %vm126, %v17, -inf
    %143 = vmax.xlane.f32.xlu0 %v142
    %v144 = vpop.xlane.xlu0 %143
    %v145 = vsel %vm126, %v18, -inf
    %146 = vmax.xlane.f32.xlu0 %v145
    %v147 = vpop.xlane.xlu0 %146
    %v148 = vsel %vm126, %v19, -inf
    %149 = vmax.xlane.f32.xlu0 %v148
    %v150 = vpop.xlane.xlu0 %149
    %v151 = vsel %vm126, %v20, -inf
    %152 = vmax.xlane.f32.xlu0 %v151
    %v153 = vpop.xlane.xlu0 %152
    %v154 = vsel %vm126, %v21, -inf
    %155 = vmax.xlane.f32.xlu0 %v154
    %v156 = vpop.xlane.xlu0 %155
    %v157 = vsel %vm126, %v22, -inf
    %158 = vmax.xlane.f32.xlu0 %v157
    %v159 = vpop.xlane.xlu0 %158
    %v160 = vsel %vm126, %v23, -inf
    %161 = vmax.xlane.f32.xlu0 %v160
    %v162 = vpop.xlane.xlu0 %161
    %v163 = vsel %vm126, %v24, -inf
    %164 = vmax.xlane.f32.xlu0 %v163
    %v165 = vpop.xlane.xlu0 %164
    %v166 = vsel %vm126, %v25, -inf
    %167 = vmax.xlane.f32.xlu0 %v166
    %v168 = vpop.xlane.xlu0 %167
    %v169 = vsel %vm126, %v26, -inf
    %170 = vmax.xlane.f32.xlu0 %v169
    %v171 = vpop.xlane.xlu0 %170
    %v172 = vsel %vm126, %v27, -inf
    %173 = vmax.xlane.f32.xlu0 %v172
    %v174 = vpop.xlane.xlu0 %173
    %v175 = vsub.f32 %v12, %v129
    %v176 = vsub.f32 %v13, %v132
    %v177 = vsub.f32 %v14, %v135
    %v178 = vsub.f32 %v15, %v138
    %v179 = vsub.f32 %v16, %v141
    %v180 = vsub.f32 %v17, %v144
    %v181 = vsub.f32 %v18, %v147
    %v182 = vsub.f32 %v19, %v150
    %v183 = vsub.f32 %v20, %v153
    %v184 = vsub.f32 %v21, %v156
    %v185 = vsub.f32 %v22, %v159
    %v186 = vsub.f32 %v23, %v162
    %v187 = vsub.f32 %v24, %v165
    %v188 = vsub.f32 %v25, %v168
    %v189 = vsub.f32 %v26, %v171
    %v190 = vsub.f32 %v27, %v174
    %v191 = vmul.f32 %v175, 1.442695
    %v192 = vpow.pop %v191
    %v193 = vmul.f32 %v176, 1.442695
    %v194 = vpow.pop %v193
    %v195 = vmul.f32 %v177, 1.442695
    %v196 = vpow.pop %v195
    %v197 = vmul.f32 %v178, 1.442695
    %v198 = vpow.pop %v197
    %v199 = vmul.f32 %v179, 1.442695
    %v200 = vpow.pop %v199
    %v201 = vmul.f32 %v180, 1.442695
    %v202 = vpow.pop %v201
    %v203 = vmul.f32 %v181, 1.442695
    %v204 = vpow.pop %v203
    %v205 = vmul.f32 %v182, 1.442695
    %v206 = vpow.pop %v205
    %v207 = vmul.f32 %v183, 1.442695
    %v208 = vpow.pop %v207
    %v209 = vmul.f32 %v184, 1.442695
    %v210 = vpow.pop %v209
    %v211 = vmul.f32 %v185, 1.442695
    %v212 = vpow.pop %v211
    %v213 = vmul.f32 %v186, 1.442695
    %v214 = vpow.pop %v213
    %v215 = vmul.f32 %v187, 1.442695
    %v216 = vpow.pop %v215
    %v217 = vmul.f32 %v188, 1.442695
    %v218 = vpow.pop %v217
    %v219 = vmul.f32 %v189, 1.442695
    %v220 = vpow.pop %v219
    %v221 = vmul.f32 %v190, 1.442695
    %v222 = vpow.pop %v221
    %v223 = vsel %vm126, %v192, 0.0
    %224 = vadd.xlane.f32.xlu0 %v223
    %v225 = vpop.xlane.xlu0 %224
    %v226 = vsel %vm126, %v194, 0.0
    %227 = vadd.xlane.f32.xlu0 %v226
    %v228 = vpop.xlane.xlu0 %227
    %v229 = vsel %vm126, %v196, 0.0
    %230 = vadd.xlane.f32.xlu0 %v229
    %v231 = vpop.xlane.xlu0 %230
    %v232 = vsel %vm126, %v198, 0.0
    %233 = vadd.xlane.f32.xlu0 %v232
    %v234 = vpop.xlane.xlu0 %233
    %v235 = vsel %vm126, %v200, 0.0
    %236 = vadd.xlane.f32.xlu0 %v235
    %v237 = vpop.xlane.xlu0 %236
    %v238 = vsel %vm126, %v202, 0.0
    %239 = vadd.xlane.f32.xlu0 %v238
    %v240 = vpop.xlane.xlu0 %239
    %v241 = vsel %vm126, %v204, 0.0
    %242 = vadd.xlane.f32.xlu0 %v241
    %v243 = vpop.xlane.xlu0 %242
    %v244 = vsel %vm126, %v206, 0.0
    %245 = vadd.xlane.f32.xlu0 %v244
    %v246 = vpop.xlane.xlu0 %245
    %v247 = vsel %vm126, %v208, 0.0
    %248 = vadd.xlane.f32.xlu0 %v247
    %v249 = vpop.xlane.xlu0 %248
    %v250 = vsel %vm126, %v210, 0.0
    %251 = vadd.xlane.f32.xlu0 %v250
    %v252 = vpop.xlane.xlu0 %251
    %v253 = vsel %vm126, %v212, 0.0
    %254 = vadd.xlane.f32.xlu0 %v253
    %v255 = vpop.xlane.xlu0 %254
    %v256 = vsel %vm126, %v214, 0.0
    %257 = vadd.xlane.f32.xlu0 %v256
    %v258 = vpop.xlane.xlu0 %257
    %v259 = vsel %vm126, %v216, 0.0
    %260 = vadd.xlane.f32.xlu0 %v259
    %v261 = vpop.xlane.xlu0 %260
    %v262 = vsel %vm126, %v218, 0.0
    %263 = vadd.xlane.f32.xlu0 %v262
    %v264 = vpop.xlane.xlu0 %263
    %v265 = vsel %vm126, %v220, 0.0
    %266 = vadd.xlane.f32.xlu0 %v265
    %v267 = vpop.xlane.xlu0 %266
    %v268 = vsel %vm126, %v222, 0.0
    %269 = vadd.xlane.f32.xlu0 %v268
    %v270 = vpop.xlane.xlu0 %269
    %v271 = vlog2.pop %v225
    %v272 = vmul.f32 %v271, 0.6931472
    %v273 = vlog2.pop %v228
    %v274 = vmul.f32 %v273, 0.6931472
    %v275 = vlog2.pop %v231
    %v276 = vmul.f32 %v275, 0.6931472
    %v277 = vlog2.pop %v234
    %v278 = vmul.f32 %v277, 0.6931472
    %v279 = vlog2.pop %v237
    %v280 = vmul.f32 %v279, 0.6931472
    %v281 = vlog2.pop %v240
    %v282 = vmul.f32 %v281, 0.6931472
    %v283 = vlog2.pop %v243
    %v284 = vmul.f32 %v283, 0.6931472
    %v285 = vlog2.pop %v246
    %v286 = vmul.f32 %v285, 0.6931472
    %v287 = vlog2.pop %v249
    %v288 = vmul.f32 %v287, 0.6931472
    %v289 = vlog2.pop %v252
    %v290 = vmul.f32 %v289, 0.6931472
    %v291 = vlog2.pop %v255
    %v292 = vmul.f32 %v291, 0.6931472
    %v293 = vlog2.pop %v258
    %v294 = vmul.f32 %v293, 0.6931472
    %v295 = vlog2.pop %v261
    %v296 = vmul.f32 %v295, 0.6931472
    %v297 = vlog2.pop %v264
    %v298 = vmul.f32 %v297, 0.6931472
    %v299 = vlog2.pop %v267
    %v300 = vmul.f32 %v299, 0.6931472
    %v301 = vlog2.pop %v270
    %v302 = vmul.f32 %v301, 0.6931472
    %v303 = vmul.f32 %v110, %v175
    %v304 = vmul.f32 %v111, %v176
    %v305 = vmul.f32 %v112, %v177
    %v306 = vmul.f32 %v113, %v178
    %v307 = vmul.f32 %v114, %v179
    %v308 = vmul.f32 %v115, %v180
    %v309 = vmul.f32 %v116, %v181
    %v310 = vmul.f32 %v117, %v182
    %v311 = vmul.f32 %v118, %v183
    %v312 = vmul.f32 %v119, %v184
    %v313 = vmul.f32 %v120, %v185
    %v314 = vmul.f32 %v121, %v186
    %v315 = vmul.f32 %v122, %v187
    %v316 = vmul.f32 %v123, %v188
    %v317 = vmul.f32 %v124, %v189
    %v318 = vmul.f32 %v125, %v190
    %v319 = vsel %vm126, %v303, 0.0
    %320 = vadd.xlane.f32.xlu0 %v319
    %v321 = vpop.xlane.xlu0 %320
    %v322 = vsel %vm126, %v304, 0.0
    %323 = vadd.xlane.f32.xlu0 %v322
    %v324 = vpop.xlane.xlu0 %323
    %v325 = vsel %vm126, %v305, 0.0
    %326 = vadd.xlane.f32.xlu0 %v325
    %v327 = vpop.xlane.xlu0 %326
    %v328 = vsel %vm126, %v306, 0.0
    %329 = vadd.xlane.f32.xlu0 %v328
    %v330 = vpop.xlane.xlu0 %329
    %v331 = vsel %vm126, %v307, 0.0
    %332 = vadd.xlane.f32.xlu0 %v331
    %v333 = vpop.xlane.xlu0 %332
    %v334 = vsel %vm126, %v308, 0.0
    %335 = vadd.xlane.f32.xlu0 %v334
    %v336 = vpop.xlane.xlu0 %335
    %v337 = vsel %vm126, %v309, 0.0
    %338 = vadd.xlane.f32.xlu0 %v337
    %v339 = vpop.xlane.xlu0 %338
    %v340 = vsel %vm126, %v310, 0.0
    %341 = vadd.xlane.f32.xlu0 %v340
    %v342 = vpop.xlane.xlu0 %341
    %v343 = vsel %vm126, %v311, 0.0
    %344 = vadd.xlane.f32.xlu0 %v343
    %v345 = vpop.xlane.xlu0 %344
    %v346 = vsel %vm126, %v312, 0.0
    %347 = vadd.xlane.f32.xlu0 %v346
    %v348 = vpop.xlane.xlu0 %347
    %v349 = vsel %vm126, %v313, 0.0
    %350 = vadd.xlane.f32.xlu0 %v349
    %v351 = vpop.xlane.xlu0 %350
    %v352 = vsel %vm126, %v314, 0.0
    %353 = vadd.xlane.f32.xlu0 %v352
    %v354 = vpop.xlane.xlu0 %353
    %v355 = vsel %vm126, %v315, 0.0
    %356 = vadd.xlane.f32.xlu0 %v355
    %v357 = vpop.xlane.xlu0 %356
    %v358 = vsel %vm126, %v316, 0.0
    %359 = vadd.xlane.f32.xlu0 %v358
    %v360 = vpop.xlane.xlu0 %359
    %v361 = vsel %vm126, %v317, 0.0
    %362 = vadd.xlane.f32.xlu0 %v361
    %v363 = vpop.xlane.xlu0 %362
    %v364 = vsel %vm126, %v318, 0.0
    %365 = vadd.xlane.f32.xlu0 %v364
    %v366 = vpop.xlane.xlu0 %365
    %v367 = vsub.f32 %v272, %v321
    %v368 = vsub.f32 %v274, %v324
    %v369 = vsub.f32 %v276, %v327
    %v370 = vsub.f32 %v278, %v330
    %v371 = vsub.f32 %v280, %v333
    %v372 = vsub.f32 %v282, %v336
    %v373 = vsub.f32 %v284, %v339
    %v374 = vsub.f32 %v286, %v342
    %v375 = vsub.f32 %v288, %v345
    %v376 = vsub.f32 %v290, %v348
    %v377 = vsub.f32 %v292, %v351
    %v378 = vsub.f32 %v294, %v354
    %v379 = vsub.f32 %v296, %v357
    %v380 = vsub.f32 %v298, %v360
    %v381 = vsub.f32 %v300, %v363
    %v382 = vsub.f32 %v302, %v366
    %v399 = vlaneseq
    %v400 = vshrl.u32 %v399, 7
    %v401 = vsub.s32 %v45, %v400
    %v402 = vrot.slane %v367, %v401
    %v403 = vadd.s32 %v45, 4294967288
    %v404 = vlaneseq
    %v405 = vshrl.u32 %v404, 7
    %v406 = vsub.s32 %v403, %v405
    %v407 = vrot.slane %v368, %v406
    %vm408 = vcmask 130112
    %v409 = vsel %vm408, %v407, %v402
    %v410 = vadd.s32 %v45, 4294967280
    %v411 = vlaneseq
    %v412 = vshrl.u32 %v411, 7
    %v413 = vsub.s32 %v410, %v412
    %v414 = vrot.slane %v369, %v413
    %vm415 = vcmask 195712
    %v416 = vsel %vm415, %v414, %v409
    %v417 = vadd.s32 %v45, 4294967272
    %v418 = vlaneseq
    %v419 = vshrl.u32 %v418, 7
    %v420 = vsub.s32 %v417, %v419
    %v421 = vrot.slane %v370, %v420
    %vm422 = vcmask 261312
    %v423 = vsel %vm422, %v421, %v416
    %v424 = vadd.s32 %v45, 4294967264
    %v425 = vlaneseq
    %v426 = vshrl.u32 %v425, 7
    %v427 = vsub.s32 %v424, %v426
    %v428 = vrot.slane %v371, %v427
    %vm429 = vcmask 326912
    %v430 = vsel %vm429, %v428, %v423
    %v431 = vadd.s32 %v45, 4294967256
    %v432 = vlaneseq
    %v433 = vshrl.u32 %v432, 7
    %v434 = vsub.s32 %v431, %v433
    %v435 = vrot.slane %v372, %v434
    %vm436 = vcmask 392512
    %v437 = vsel %vm436, %v435, %v430
    %v438 = vadd.s32 %v45, 4294967248
    %v439 = vlaneseq
    %v440 = vshrl.u32 %v439, 7
    %v441 = vsub.s32 %v438, %v440
    %v442 = vrot.slane %v373, %v441
    %vm443 = vcmask 458112
    %v444 = vsel %vm443, %v442, %v437
    %v445 = vadd.s32 %v45, 4294967240
    %v446 = vlaneseq
    %v447 = vshrl.u32 %v446, 7
    %v448 = vsub.s32 %v445, %v447
    %v449 = vrot.slane %v374, %v448
    %vm450 = vcmask 523712
    %v451 = vsel %vm450, %v449, %v444
    %v452 = vadd.s32 %v45, 4294967232
    %v453 = vlaneseq
    %v454 = vshrl.u32 %v453, 7
    %v455 = vsub.s32 %v452, %v454
    %v456 = vrot.slane %v375, %v455
    %vm457 = vcmask 589312
    %v458 = vsel %vm457, %v456, %v451
    %v459 = vadd.s32 %v45, 4294967224
    %v460 = vlaneseq
    %v461 = vshrl.u32 %v460, 7
    %v462 = vsub.s32 %v459, %v461
    %v463 = vrot.slane %v376, %v462
    %vm464 = vcmask 654912
    %v465 = vsel %vm464, %v463, %v458
    %v466 = vadd.s32 %v45, 4294967216
    %v467 = vlaneseq
    %v468 = vshrl.u32 %v467, 7
    %v469 = vsub.s32 %v466, %v468
    %v470 = vrot.slane %v377, %v469
    %vm471 = vcmask 720512
    %v472 = vsel %vm471, %v470, %v465
    %v473 = vadd.s32 %v45, 4294967208
    %v474 = vlaneseq
    %v475 = vshrl.u32 %v474, 7
    %v476 = vsub.s32 %v473, %v475
    %v477 = vrot.slane %v378, %v476
    %vm478 = vcmask 786112
    %v479 = vsel %vm478, %v477, %v472
    %v480 = vadd.s32 %v45, 4294967200
    %v481 = vlaneseq
    %v482 = vshrl.u32 %v481, 7
    %v483 = vsub.s32 %v480, %v482
    %v484 = vrot.slane %v379, %v483
    %vm485 = vcmask 851712
    %v486 = vsel %vm485, %v484, %v479
    %v487 = vadd.s32 %v45, 4294967192
    %v488 = vlaneseq
    %v489 = vshrl.u32 %v488, 7
    %v490 = vsub.s32 %v487, %v489
    %v491 = vrot.slane %v380, %v490
    %vm492 = vcmask 917312
    %v493 = vsel %vm492, %v491, %v486
    %v494 = vadd.s32 %v45, 4294967184
    %v495 = vlaneseq
    %v496 = vshrl.u32 %v495, 7
    %v497 = vsub.s32 %v494, %v496
    %v498 = vrot.slane %v381, %v497
    %vm499 = vcmask 982912
    %v500 = vsel %vm499, %v498, %v493
    %v501 = vadd.s32 %v45, 4294967176
    %v502 = vlaneseq
    %v503 = vshrl.u32 %v502, 7
    %v504 = vsub.s32 %v501, %v503
    %v505 = vrot.slane %v382, %v504
    %vm506 = vcmask 1048512
    %v507 = vsel %vm506, %v505, %v500
    %509 = vst [vmem:[#allocation2] sm:$0x1] %v507
    // Predicated region
    $region10: #{tpu_custom_call.1} parent=1 // pred_check
      _
    $region11: #{tpu_custom_call.1} parent=1 // pred_check_branch
      %511 = sbr.rel (0) target = $region13
    $region12: #{tpu_custom_call.1} parent=1 // pred_region
      %s513 = ssub.s32 16, 16
      %514 = vsyncadd [#allocation3], %s513
      %s516 = sshll.u32 [#allocation2], 4
      %s517 = int_to_ptr.vmem [resolvable:$true] %s516
      %519 = dma.vmem_to_hbm [thread:$0]  %s517, 16, %s2, [#allocation3]
    $region13: #{tpu_custom_call.1} parent=1 // pred_fallthru
      _
    // Predicated region
    $region14: #{tpu_custom_call.1} parent=1 // pred_check
      _
    $region15: #{tpu_custom_call.1} parent=1 // pred_check_branch
      %521 = sbr.rel (0) target = $region17
    $region16: #{tpu_custom_call.1} parent=1 // pred_region
      %522 = dma.done [#allocation3], 16
    $region17: #{tpu_custom_call.1} parent=1 // pred_fallthru
      _
    %523 = vsyncpa [#allocation3], 1

</llo_original>
